<compile_context>
chip_gen: v7x
topology: tpu7x:2x2x1
jax: 0.10.0
libtpu: 0.0.40
codegen_flags: <defaults>
</compile_context>

<pallas_src>
import jax
import jax.numpy as jnp
from jax.experimental import pallas as pl
from jax.experimental.pallas import tpu as pltpu


def _swish(v):
    # EUP sigmoid + VPU multiply, all in f32.
    return v * jax.nn.sigmoid(v)


def mlp_kernel(x_ref, w1_ref, b1_ref, w2_ref, b2_ref, w3_ref, b3_ref, o_ref):
    # x_ref : [TB, in]   f32  (streamed, double-buffered by the pipeline)
    # wN_ref: [out, in]  f32  (resident, single-buffered, PyTorch weight layout)
    # bN_ref: [out, 1]   f32  (resident, broadcast along lanes)
    # o_ref : [out, TB]  f32  (streamed) -- batch rides the 128-lane axis.
    x = x_ref[...]

    # Layer 1: contract the shared `in` axis of W1 [mid, in] and x [TB, in]
    # -> lane-major [mid, TB] directly, no transpose of x needed.
    h = jax.lax.dot_general(
        w1_ref[...], x,
        dimension_numbers=(((1,), (1,)), ((), ())),
        preferred_element_type=jnp.float32,
    )
    h = _swish(h + b1_ref[...])

    # Layer 2: Linear + Swish   (Dropout == identity in eval mode)
    h = jnp.dot(w2_ref[...], h, preferred_element_type=jnp.float32)
    h = _swish(h + b2_ref[...])

    # Layer 3: Linear + Swish
    h = jnp.dot(w3_ref[...], h, preferred_element_type=jnp.float32)
    o_ref[...] = _swish(h + b3_ref[...]).astype(o_ref.dtype)


def _pick_batch_tile(batch, max_tile):
    """Largest multiple-of-128 tile <= max_tile that divides `batch`, preferring
    at least two equal tiles (so v7x megacore gets work on both TensorCores).
    Falls back to the full batch when it is not a multiple of 128."""
    if batch % 128 != 0:
        return batch
    target = batch // 2 if batch % 256 == 0 else batch
    tb = min(max_tile, target, batch)
    tb -= tb % 128
    tb = max(tb, 128)
    while batch % tb != 0:
        tb -= 128
    return tb


def mymodel_forward(x, params, *, block_b=4096, lane_major_output=False):
    """x: [B, in_features] float32.

    Returns [B, out_features] float32 (PyTorch layout) by default, or the
    kernel's native lane-major [out_features, B] when lane_major_output=True.
    Matches MyModel.forward (Swish activation) in eval mode (Dropout = identity).
    """
    w1, b1, w2, b2, w3, b3 = (params[k] for k in ("w1", "b1", "w2", "b2", "w3", "b3"))
    B, in_features = x.shape
    mid = w1.shape[0]
    out_features = w3.shape[0]

    TB = _pick_batch_tile(B, block_b)
    grid = (B // TB,)

    # Streamed operands tiled along the batch axis; weights/biases resident and
    # single-buffered (constant index_map -> DMA'd once).
    x_spec = pl.BlockSpec((TB, in_features), lambda i: (i, 0))
    o_spec = pl.BlockSpec((out_features, TB), lambda i: (0, i))

    def resident(shape):
        return pl.BlockSpec(shape, lambda i: (0, 0), pipeline_mode=pl.Buffered(1))

    flops = 2 * B * (in_features * mid + mid * mid + mid * out_features)
    transcendentals = B * (2 * mid + out_features)
    bytes_accessed = (
        x.size * x.dtype.itemsize
        + sum(params[k].size * params[k].dtype.itemsize
              for k in ("w1", "b1", "w2", "b2", "w3", "b3"))
        + B * out_features * 4
    )

    out_lane_major = pl.pallas_call(
        mlp_kernel,
        out_shape=jax.ShapeDtypeStruct((out_features, B), jnp.float32),
        grid=grid,
        in_specs=[
            x_spec,
            resident((mid, in_features)), resident((mid, 1)),
            resident((mid, mid)), resident((mid, 1)),
            resident((out_features, mid)), resident((out_features, 1)),
        ],
        out_specs=o_spec,
        compiler_params=pltpu.CompilerParams(
            dimension_semantics=("parallel",),
            vmem_limit_bytes=32 * 1024 * 1024,
        ),
        cost_estimate=pl.CostEstimate(
            flops=flops,
            transcendentals=transcendentals,
            bytes_accessed=bytes_accessed,
        ),
    )(x, w1, b1, w2, b2, w3, b3)

    if lane_major_output:
        return out_lane_major                 # [out_features, B]
    return out_lane_major.T                   # [B, out_features] (PyTorch layout)


def init_params(key, in_features, mid_features, out_features):
    """Deterministic PyTorch-Linear-style init (uniform +-1/sqrt(fan_in)).
    Weights stored PyTorch-style [out, in], biases [out, 1], all f32 — the
    exact dtypes the kernel consumes, so no per-call casting is needed."""
    ks = jax.random.split(key, 6)

    def lin(kw, kb, fan_in, fan_out):
        bound = 1.0 / jnp.sqrt(jnp.float32(fan_in))
        w = jax.random.uniform(kw, (fan_out, fan_in), jnp.float32, -bound, bound)
        b = jax.random.uniform(kb, (fan_out, 1), jnp.float32, -bound, bound)
        return w, b

    w1, b1 = lin(ks[0], ks[1], in_features, mid_features)
    w2, b2 = lin(ks[2], ks[3], mid_features, mid_features)
    w3, b3 = lin(ks[4], ks[5], mid_features, out_features)
    return dict(w1=w1, b1=b1, w2=w2, b2=b2, w3=w3, b3=b3)


def _ref_forward(x, p):
    """Pure-JAX f32 reference (HIGHEST-precision matmuls) mirroring the PyTorch
    eval-mode forward pass."""
    def swish(v):
        return v * jax.nn.sigmoid(v)

    hp = jax.lax.Precision.HIGHEST
    h = swish(jnp.dot(x, p["w1"].T, precision=hp) + p["b1"].reshape(1, -1))
    h = swish(jnp.dot(h, p["w2"].T, precision=hp) + p["b2"].reshape(1, -1))
    return swish(jnp.dot(h, p["w3"].T, precision=hp) + p["b3"].reshape(1, -1))


if __name__ == "__main__":
    # MyModel(in_features=16, out_features=3,
    #         args={'activation': 'Swish', 'mid_features': 32, 'dropout': 0.2})
    in_features, mid_features, out_features = 16, 32, 3
    batch = 256  # multiple of 256 -> two 128-wide lane-dense tiles (exercises
                 # the pipeline and gives both v7x TensorCores work)

    key = jax.random.PRNGKey(0)
    kx, kp = jax.random.split(key)
    x = jax.random.normal(kx, (batch, in_features), dtype=jnp.float32)
    params = init_params(kp, in_features, mid_features, out_features)

    fwd = jax.jit(lambda xx, pp: mymodel_forward(xx, pp))
    out = fwd(x, params)
    jax.block_until_ready(out)

    ref = _ref_forward(x, params)
    assert out.shape == (batch, out_features)
    max_err = float(jnp.max(jnp.abs(out - ref)))
    assert jnp.allclose(out, ref, atol=2e-3, rtol=2e-3), max_err

    print("KERNEL_OK")
</pallas_src>

<mosaic_0001>
module attributes {stable_mosaic.version = 11 : i64} {
  func.func @mlp_kernel(%arg0: i32, %arg1: memref<128x16xf32, #tpu.memory_space<vmem>>, %arg2: memref<32x16xf32, #tpu.memory_space<vmem>>, %arg3: memref<32x1xf32, #tpu.memory_space<vmem>>, %arg4: memref<32x32xf32, #tpu.memory_space<vmem>>, %arg5: memref<32x1xf32, #tpu.memory_space<vmem>>, %arg6: memref<3x32xf32, #tpu.memory_space<vmem>>, %arg7: memref<3x1xf32, #tpu.memory_space<vmem>>, %arg8: memref<3x128xf32, #tpu.memory_space<vmem>>) attributes {dimension_semantics = [#tpu.dimension_semantics<parallel>], iteration_bounds = array<i64: 2>, scalar_prefetch = 0 : i64, scratch_operands = 0 : i64, tpu.core_type = #tpu.core_type<tc>, window_params = [{transform_indices = @transform_0, window_bounds = array<i64: 128, 16>}, {pipeline_mode = #tpu.pipeline_mode<synchronous>, transform_indices = @transform_1, window_bounds = array<i64: 32, 16>}, {pipeline_mode = #tpu.pipeline_mode<synchronous>, transform_indices = @transform_2, window_bounds = array<i64: 32, 1>}, {pipeline_mode = #tpu.pipeline_mode<synchronous>, transform_indices = @transform_3, window_bounds = array<i64: 32, 32>}, {pipeline_mode = #tpu.pipeline_mode<synchronous>, transform_indices = @transform_4, window_bounds = array<i64: 32, 1>}, {pipeline_mode = #tpu.pipeline_mode<synchronous>, transform_indices = @transform_5, window_bounds = array<i64: 3, 32>}, {pipeline_mode = #tpu.pipeline_mode<synchronous>, transform_indices = @transform_6, window_bounds = array<i64: 3, 1>}, {transform_indices = @transform_7, window_bounds = array<i64: 3, 128>}]} {
    %c0 = arith.constant 0 : index
    %c0_0 = arith.constant 0 : index
    %0 = vector.load %arg1[%c0, %c0_0] : memref<128x16xf32, #tpu.memory_space<vmem>>, vector<128x16xf32>
    %c0_1 = arith.constant 0 : index
    %c0_2 = arith.constant 0 : index
    %1 = vector.load %arg2[%c0_1, %c0_2] : memref<32x16xf32, #tpu.memory_space<vmem>>, vector<32x16xf32>
    %cst = arith.constant dense<0.000000e+00> : vector<32x128xf32>
    %2 = tpu.matmul %1, %0, %cst {dimension_numbers = #tpu.dot_dimension_numbers<[1], [1], [0], [0], [0, 0, 1, 0], [], []>} : vector<32x16xf32>, vector<128x16xf32>, vector<32x128xf32> -> vector<32x128xf32>
    %c0_3 = arith.constant 0 : index
    %c0_4 = arith.constant 0 : index
    %3 = vector.load %arg3[%c0_3, %c0_4] : memref<32x1xf32, #tpu.memory_space<vmem>>, vector<32x1xf32>
    %4 = vector.broadcast %3 : vector<32x1xf32> to vector<32x128xf32>
    %5 = arith.addf %2, %4 : vector<32x128xf32>
    %6 = arith.negf %5 : vector<32x128xf32>
    %7 = math.exp %6 : vector<32x128xf32>
    %cst_5 = arith.constant 1.000000e+00 : f32
    %8 = vector.broadcast %cst_5 : f32 to vector<32x128xf32>
    %9 = arith.addf %8, %7 : vector<32x128xf32>
    %10 = arith.divf %8, %9 : vector<32x128xf32>
    %11 = arith.mulf %5, %10 : vector<32x128xf32>
    %c0_6 = arith.constant 0 : index
    %c0_7 = arith.constant 0 : index
    %12 = vector.load %arg4[%c0_6, %c0_7] : memref<32x32xf32, #tpu.memory_space<vmem>>, vector<32x32xf32>
    %cst_8 = arith.constant dense<0.000000e+00> : vector<32x128xf32>
    %13 = tpu.matmul %12, %11, %cst_8 {dimension_numbers = #tpu.dot_dimension_numbers<[1], [0], [0], [1], [0, 0, 1, 1], [], []>} : vector<32x32xf32>, vector<32x128xf32>, vector<32x128xf32> -> vector<32x128xf32>
    %c0_9 = arith.constant 0 : index
    %c0_10 = arith.constant 0 : index
    %14 = vector.load %arg5[%c0_9, %c0_10] : memref<32x1xf32, #tpu.memory_space<vmem>>, vector<32x1xf32>
    %15 = vector.broadcast %14 : vector<32x1xf32> to vector<32x128xf32>
    %16 = arith.addf %13, %15 : vector<32x128xf32>
    %17 = arith.negf %16 : vector<32x128xf32>
    %18 = math.exp %17 : vector<32x128xf32>
    %cst_11 = arith.constant 1.000000e+00 : f32
    %19 = vector.broadcast %cst_11 : f32 to vector<32x128xf32>
    %20 = arith.addf %19, %18 : vector<32x128xf32>
    %21 = arith.divf %19, %20 : vector<32x128xf32>
    %22 = arith.mulf %16, %21 : vector<32x128xf32>
    %c0_12 = arith.constant 0 : index
    %c0_13 = arith.constant 0 : index
    %23 = vector.load %arg6[%c0_12, %c0_13] : memref<3x32xf32, #tpu.memory_space<vmem>>, vector<3x32xf32>
    %cst_14 = arith.constant dense<0.000000e+00> : vector<3x128xf32>
    %24 = tpu.matmul %23, %22, %cst_14 {dimension_numbers = #tpu.dot_dimension_numbers<[1], [0], [0], [1], [0, 0, 1, 1], [], []>} : vector<3x32xf32>, vector<32x128xf32>, vector<3x128xf32> -> vector<3x128xf32>
    %c0_15 = arith.constant 0 : index
    %c0_16 = arith.constant 0 : index
    %25 = vector.load %arg7[%c0_15, %c0_16] : memref<3x1xf32, #tpu.memory_space<vmem>>, vector<3x1xf32>
    %26 = vector.broadcast %25 : vector<3x1xf32> to vector<3x128xf32>
    %27 = arith.addf %24, %26 : vector<3x128xf32>
    %28 = arith.negf %27 : vector<3x128xf32>
    %29 = math.exp %28 : vector<3x128xf32>
    %cst_17 = arith.constant 1.000000e+00 : f32
    %30 = vector.broadcast %cst_17 : f32 to vector<3x128xf32>
    %31 = arith.addf %30, %29 : vector<3x128xf32>
    %32 = arith.divf %30, %31 : vector<3x128xf32>
    %33 = arith.mulf %27, %32 : vector<3x128xf32>
    %c0_18 = arith.constant 0 : index
    %c0_19 = arith.constant 0 : index
    %34 = vector.load %arg8[%c0_18, %c0_19] : memref<3x128xf32, #tpu.memory_space<vmem>>, vector<3x128xf32>
    tpu.vector_store %arg8[%c0_18, %c0_19], %33 {strides = array<i32>} : memref<3x128xf32, #tpu.memory_space<vmem>>, vector<3x128xf32>,
    return
  }
  func.func @transform_0(%arg0: i32) -> (i32, i32) {
    %c0_i32 = arith.constant 0 : i32
    %c0_i32_0 = arith.constant 0 : i32
    return %arg0, %c0_i32 : i32, i32
  }
  func.func @transform_1(%arg0: i32) -> (i32, i32) {
    %c0_i32 = arith.constant 0 : i32
    %c0_i32_0 = arith.constant 0 : i32
    %c0_i32_1 = arith.constant 0 : i32
    return %c0_i32, %c0_i32_0 : i32, i32
  }
  func.func @transform_2(%arg0: i32) -> (i32, i32) {
    %c0_i32 = arith.constant 0 : i32
    %c0_i32_0 = arith.constant 0 : i32
    %c0_i32_1 = arith.constant 0 : i32
    return %c0_i32, %c0_i32_0 : i32, i32
  }
  func.func @transform_3(%arg0: i32) -> (i32, i32) {
    %c0_i32 = arith.constant 0 : i32
    %c0_i32_0 = arith.constant 0 : i32
    %c0_i32_1 = arith.constant 0 : i32
    return %c0_i32, %c0_i32_0 : i32, i32
  }
  func.func @transform_4(%arg0: i32) -> (i32, i32) {
    %c0_i32 = arith.constant 0 : i32
    %c0_i32_0 = arith.constant 0 : i32
    %c0_i32_1 = arith.constant 0 : i32
    return %c0_i32, %c0_i32_0 : i32, i32
  }
  func.func @transform_5(%arg0: i32) -> (i32, i32) {
    %c0_i32 = arith.constant 0 : i32
    %c0_i32_0 = arith.constant 0 : i32
    %c0_i32_1 = arith.constant 0 : i32
    return %c0_i32, %c0_i32_0 : i32, i32
  }
  func.func @transform_6(%arg0: i32) -> (i32, i32) {
    %c0_i32 = arith.constant 0 : i32
    %c0_i32_0 = arith.constant 0 : i32
    %c0_i32_1 = arith.constant 0 : i32
    return %c0_i32, %c0_i32_0 : i32, i32
  }
  func.func @transform_7(%arg0: i32) -> (i32, i32) {
    %c0_i32 = arith.constant 0 : i32
    %c0_i32_0 = arith.constant 0 : i32
    return %c0_i32, %arg0 : i32, i32
  }
}

</mosaic_0001>

<llo_original>
// kernel: _lambda_.1
$region0: #{_lambda_.1}
  #allocation0 [shape = 'u32[]', space=smem, size = 0x4, offset = 0x4, fixed_abs, tag = 'smem constant byte address 0x4 - core index']
  #allocation1 [shape = 'u32[144,128]{1,0:T(1,128)}', space=vmem, size = 0x12000, scoped, tag = 'internal scratch']
  %s0 = inlined_call_operand.vmem [shape: f32[256,16], index: 0, kind: input, shape index: {}]
  %s1 = inlined_call_operand.vmem [shape: f32[32,16], index: 1, kind: input, shape index: {}]
  %s2 = inlined_call_operand.vmem [shape: f32[32,1], index: 2, kind: input, shape index: {}]
  %s3 = inlined_call_operand.vmem [shape: f32[32,32], index: 3, kind: input, shape index: {}]
  %s4 = inlined_call_operand.vmem [shape: f32[32,1], index: 4, kind: input, shape index: {}]
  %s5 = inlined_call_operand.vmem [shape: f32[3,32], index: 5, kind: input, shape index: {}]
  %s6 = inlined_call_operand.vmem [shape: f32[3,1], index: 6, kind: input, shape index: {}]
  %s7 = inlined_call_operand.hbm [shape: f32[3,256], index: 7, kind: output, shape index: {}]
  %s8 = sld [smem:[#allocation0]]
  $region61: #{_lambda_.1} parent=0
    _
  %s10 = ssub.s32 1, %s8
  %s11 = scalar_select 0, %s10, %s8
  $region1: #{_lambda_.1} parent=0
    #allocation2 [shape = 'u8[4096]{0}', space=vmem, size = 0x1000, scoped, tag = 'output window, operand 0']
    #allocation3 [shape = 's32[2]{0}', space=sflag, size = 0x8, scoped, tag = 'scoped memory for _lambda_.1']
    %12 = vsyncpa [#allocation3], 0
    %s13 = scalar_lea.sflag [#allocation3], 1
    %14 = vsyncpa %s13, 0
    loop: start=0, step=1, limit=4
    $region2: #{_lambda_.1} parent=1 // loop_pre_header
      _
    $region3: #{_lambda_.1} parent=1 // loop_header
      %s16 = sphi 0, %s20
      %p17 = scmp.ge.s32.totalorder %s16, 4
      %s26 = sphi 0, %s28
      %s29 = sphi 0, %s26
      %s30 = sphi 0, %s29
      %s46 = sphi 0, %s30
      %s50 = sphi 0, %s50
      %s52 = sphi 0, %s50
      %s53 = sphi 0, %s52
      %s67 = sphi 0, %s53
      %s71 = sphi 0, %s71
      %s73 = sphi 0, %s71
      %s74 = sphi 0, %s73
      %s88 = sphi 0, %s74
      %s92 = sphi 0, %s92
      %s94 = sphi 0, %s92
      %s95 = sphi 0, %s94
      %s109 = sphi 0, %s95
      %s113 = sphi 0, %s113
      %s115 = sphi 0, %s113
      %s116 = sphi 0, %s115
      %s130 = sphi 0, %s116
      %s134 = sphi 0, %s134
      %s136 = sphi 0, %s134
      %s137 = sphi 0, %s136
      %s151 = sphi 0, %s137
      %s155 = sphi 0, %s155
      %s157 = sphi 0, %s155
      %s158 = sphi 0, %s157
      %s172 = sphi 0, %s158
      %s178 = sphi 0, %s180
      %s181 = sphi 0, %s178
      %s182 = sphi 0, %s181
      %s198 = sphi 0, %s182
    $region4: #{_lambda_.1} parent=1 // loop_header_branch
      %19 = sbr.rel (%p17) target = $region8
    $region5: #{_lambda_.1} parent=1 // loop_body
      %s21 = ssub.s32 %s16, 1
      %s22 = ssub.s32 %s16, 2
      %s23 = sadd.s32 %s16, 1
      %s24 = ssub.s32 %s16, %s23
      %p25 = scmp.eq.s32.totalorder %s24, 0
      %s27 = sadd.s32 %s26, 1
      %s28 = scalar_select %p25, %s26, %s27
      %p31 = pneg %p25
      %p32 = scmp.eq.s32.totalorder %s16, 1
      %p33 = por %p31, %p32
      %p34 = scmp.ne.s32.totalorder %s26, %s29
      %p35 = scmp.eq.s32.totalorder %s16, 0
      %p36 = por %p34, %p35
      %p37 = scmp.ne.s32.totalorder %s26, %s29
      %p38 = scmp.eq.s32.totalorder %s21, 1
      %p39 = por %p37, %p38
      %p40 = scmp.ne.s32.totalorder %s29, %s30
      %p41 = scmp.eq.s32.totalorder %s21, 0
      %p42 = por %p40, %p41
      %p43 = scmp.ne.s32.totalorder %s29, %s30
      %p44 = scmp.eq.s32.totalorder %s22, 1
      %p45 = por %p43, %p44
      %p47 = scmp.ne.s32.totalorder %s30, %s46
      %p48 = scmp.eq.s32.totalorder %s22, 0
      %p49 = por %p47, %p48
      %s51 = sadd.s32 %s50, 1
      %p54 = scmp.eq.s32.totalorder %s16, 1
      %p55 = scmp.ne.s32.totalorder %s50, %s52
      %p56 = scmp.eq.s32.totalorder %s16, 0
      %p57 = por %p55, %p56
      %p58 = scmp.ne.s32.totalorder %s50, %s52
      %p59 = scmp.eq.s32.totalorder %s21, 1
      %p60 = por %p58, %p59
      %p61 = scmp.ne.s32.totalorder %s52, %s53
      %p62 = scmp.eq.s32.totalorder %s21, 0
      %p63 = por %p61, %p62
      %p64 = scmp.ne.s32.totalorder %s52, %s53
      %p65 = scmp.eq.s32.totalorder %s22, 1
      %p66 = por %p64, %p65
      %p68 = scmp.ne.s32.totalorder %s53, %s67
      %p69 = scmp.eq.s32.totalorder %s22, 0
      %p70 = por %p68, %p69
      %s72 = sadd.s32 %s71, 1
      %p75 = scmp.eq.s32.totalorder %s16, 1
      %p76 = scmp.ne.s32.totalorder %s71, %s73
      %p77 = scmp.eq.s32.totalorder %s16, 0
      %p78 = por %p76, %p77
      %p79 = scmp.ne.s32.totalorder %s71, %s73
      %p80 = scmp.eq.s32.totalorder %s21, 1
      %p81 = por %p79, %p80
      %p82 = scmp.ne.s32.totalorder %s73, %s74
      %p83 = scmp.eq.s32.totalorder %s21, 0
      %p84 = por %p82, %p83
      %p85 = scmp.ne.s32.totalorder %s73, %s74
      %p86 = scmp.eq.s32.totalorder %s22, 1
      %p87 = por %p85, %p86
      %p89 = scmp.ne.s32.totalorder %s74, %s88
      %p90 = scmp.eq.s32.totalorder %s22, 0
      %p91 = por %p89, %p90
      %s93 = sadd.s32 %s92, 1
      %p96 = scmp.eq.s32.totalorder %s16, 1
      %p97 = scmp.ne.s32.totalorder %s92, %s94
      %p98 = scmp.eq.s32.totalorder %s16, 0
      %p99 = por %p97, %p98
      %p100 = scmp.ne.s32.totalorder %s92, %s94
      %p101 = scmp.eq.s32.totalorder %s21, 1
      %p102 = por %p100, %p101
      %p103 = scmp.ne.s32.totalorder %s94, %s95
      %p104 = scmp.eq.s32.totalorder %s21, 0
      %p105 = por %p103, %p104
      %p106 = scmp.ne.s32.totalorder %s94, %s95
      %p107 = scmp.eq.s32.totalorder %s22, 1
      %p108 = por %p106, %p107
      %p110 = scmp.ne.s32.totalorder %s95, %s109
      %p111 = scmp.eq.s32.totalorder %s22, 0
      %p112 = por %p110, %p111
      %s114 = sadd.s32 %s113, 1
      %p117 = scmp.eq.s32.totalorder %s16, 1
      %p118 = scmp.ne.s32.totalorder %s113, %s115
      %p119 = scmp.eq.s32.totalorder %s16, 0
      %p120 = por %p118, %p119
      %p121 = scmp.ne.s32.totalorder %s113, %s115
      %p122 = scmp.eq.s32.totalorder %s21, 1
      %p123 = por %p121, %p122
      %p124 = scmp.ne.s32.totalorder %s115, %s116
      %p125 = scmp.eq.s32.totalorder %s21, 0
      %p126 = por %p124, %p125
      %p127 = scmp.ne.s32.totalorder %s115, %s116
      %p128 = scmp.eq.s32.totalorder %s22, 1
      %p129 = por %p127, %p128
      %p131 = scmp.ne.s32.totalorder %s116, %s130
      %p132 = scmp.eq.s32.totalorder %s22, 0
      %p133 = por %p131, %p132
      %s135 = sadd.s32 %s134, 1
      %p138 = scmp.eq.s32.totalorder %s16, 1
      %p139 = scmp.ne.s32.totalorder %s134, %s136
      %p140 = scmp.eq.s32.totalorder %s16, 0
      %p141 = por %p139, %p140
      %p142 = scmp.ne.s32.totalorder %s134, %s136
      %p143 = scmp.eq.s32.totalorder %s21, 1
      %p144 = por %p142, %p143
      %p145 = scmp.ne.s32.totalorder %s136, %s137
      %p146 = scmp.eq.s32.totalorder %s21, 0
      %p147 = por %p145, %p146
      %p148 = scmp.ne.s32.totalorder %s136, %s137
      %p149 = scmp.eq.s32.totalorder %s22, 1
      %p150 = por %p148, %p149
      %p152 = scmp.ne.s32.totalorder %s137, %s151
      %p153 = scmp.eq.s32.totalorder %s22, 0
      %p154 = por %p152, %p153
      %s156 = sadd.s32 %s155, 1
      %p159 = scmp.eq.s32.totalorder %s16, 1
      %p160 = scmp.ne.s32.totalorder %s155, %s157
      %p161 = scmp.eq.s32.totalorder %s16, 0
      %p162 = por %p160, %p161
      %p163 = scmp.ne.s32.totalorder %s155, %s157
      %p164 = scmp.eq.s32.totalorder %s21, 1
      %p165 = por %p163, %p164
      %p166 = scmp.ne.s32.totalorder %s157, %s158
      %p167 = scmp.eq.s32.totalorder %s21, 0
      %p168 = por %p166, %p167
      %p169 = scmp.ne.s32.totalorder %s157, %s158
      %p170 = scmp.eq.s32.totalorder %s22, 1
      %p171 = por %p169, %p170
      %p173 = scmp.ne.s32.totalorder %s158, %s172
      %p174 = scmp.eq.s32.totalorder %s22, 0
      %p175 = por %p173, %p174
      %s176 = ssub.s32 %s16, %s23
      %p177 = scmp.eq.s32.totalorder %s176, 0
      %s179 = sadd.s32 %s178, 1
      %s180 = scalar_select %p177, %s178, %s179
      %p183 = pneg %p177
      %p184 = scmp.eq.s32.totalorder %s16, 1
      %p185 = por %p183, %p184
      %p186 = scmp.ne.s32.totalorder %s178, %s181
      %p187 = scmp.eq.s32.totalorder %s16, 0
      %p188 = por %p186, %p187
      %p189 = scmp.ne.s32.totalorder %s178, %s181
      %p190 = scmp.eq.s32.totalorder %s21, 1
      %p191 = por %p189, %p190
      %p192 = scmp.ne.s32.totalorder %s181, %s182
      %p193 = scmp.eq.s32.totalorder %s21, 0
      %p194 = por %p192, %p193
      %p195 = scmp.ne.s32.totalorder %s181, %s182
      %p196 = scmp.eq.s32.totalorder %s22, 1
      %p197 = por %p195, %p196
      %p199 = scmp.ne.s32.totalorder %s182, %s198
      %p200 = scmp.eq.s32.totalorder %s22, 0
      %p201 = por %p199, %p200
      %p202 = scmp.le.s32.totalorder 1, %s16
      %p203 = scmp.lt.s32.totalorder %s16, 3
      %p204 = pnand %p202, %p203
      %p205 = pneg %p204
      // Predicated region
      $region9: #{_lambda_.1} parent=5 // pred_check
        _
      $region10: #{_lambda_.1} parent=5 // pred_check_branch
        %207 = sbr.rel (%p204) target = $region12
      $region11: #{_lambda_.1} parent=5 // pred_region
        %s208 = ssub.s32 %s16, 1
        // Predicated region
        $region13: #{_lambda_.1} parent=11 // pred_check
          %p209 = pneg %p63
        $region14: #{_lambda_.1} parent=11 // pred_check_branch
          %211 = sbr.rel (%p209) target = $region16
        $region15: #{_lambda_.1} parent=11 // pred_region
          _
        $region16: #{_lambda_.1} parent=11 // pred_fallthru
          _
        // Predicated region
        $region17: #{_lambda_.1} parent=11 // pred_check
          %p212 = pneg %p84
        $region18: #{_lambda_.1} parent=11 // pred_check_branch
          %214 = sbr.rel (%p212) target = $region20
        $region19: #{_lambda_.1} parent=11 // pred_region
          _
        $region20: #{_lambda_.1} parent=11 // pred_fallthru
          _
        // Predicated region
        $region21: #{_lambda_.1} parent=11 // pred_check
          %p215 = pneg %p105
        $region22: #{_lambda_.1} parent=11 // pred_check_branch
          %217 = sbr.rel (%p215) target = $region24
        $region23: #{_lambda_.1} parent=11 // pred_region
          _
        $region24: #{_lambda_.1} parent=11 // pred_fallthru
          _
        // Predicated region
        $region25: #{_lambda_.1} parent=11 // pred_check
          %p218 = pneg %p126
        $region26: #{_lambda_.1} parent=11 // pred_check_branch
          %220 = sbr.rel (%p218) target = $region28
        $region27: #{_lambda_.1} parent=11 // pred_region
          _
        $region28: #{_lambda_.1} parent=11 // pred_fallthru
          _
        // Predicated region
        $region29: #{_lambda_.1} parent=11 // pred_check
          %p221 = pneg %p147
        $region30: #{_lambda_.1} parent=11 // pred_check_branch
          %223 = sbr.rel (%p221) target = $region32
        $region31: #{_lambda_.1} parent=11 // pred_region
          _
        $region32: #{_lambda_.1} parent=11 // pred_fallthru
          _
        // Predicated region
        $region33: #{_lambda_.1} parent=11 // pred_check
          %p224 = pneg %p168
        $region34: #{_lambda_.1} parent=11 // pred_check_branch
          %226 = sbr.rel (%p224) target = $region36
        $region35: #{_lambda_.1} parent=11 // pred_region
          _
        $region36: #{_lambda_.1} parent=11 // pred_fallthru
          _
      $region12: #{_lambda_.1} parent=5 // pred_fallthru
        _
      %p227 = scmp.lt.s32.totalorder %s16, 2
      // Predicated region
      $region37: #{_lambda_.1} parent=5 // pred_check
        %p228 = pneg %p227
      $region38: #{_lambda_.1} parent=5 // pred_check_branch
        %230 = sbr.rel (%p228) target = $region40
      $region39: #{_lambda_.1} parent=5 // pred_region
        // Predicated region
        $region41: #{_lambda_.1} parent=39 // pred_check
          %p231 = pneg %p36
        $region42: #{_lambda_.1} parent=39 // pred_check_branch
          %233 = sbr.rel (%p231) target = $region44
        $region43: #{_lambda_.1} parent=39 // pred_region
          %s234 = smul.u32 16, %s16
          %p235 = scmp.lt.s32.totalorder %s234, 31
          %s236 = scalar_select %p235, %s234, 31
          %s237 = smul.addr %s236, 8
          %s238 = scalar_lea.vmem %s0, %s237
          %s239 = smul.u32 16, %s16
        $region44: #{_lambda_.1} parent=39 // pred_fallthru
          _
      $region40: #{_lambda_.1} parent=5 // pred_fallthru
        _
      %p240 = scmp.le.s32.totalorder 1, %s16
      %p241 = scmp.lt.s32.totalorder %s16, 3
      %p242 = pnand %p240, %p241
      %p243 = pneg %p242
      // Predicated region
      $region45: #{_lambda_.1} parent=5 // pred_check
        _
      $region46: #{_lambda_.1} parent=5 // pred_check_branch
        %245 = sbr.rel (%p242) target = $region48
      $region47: #{_lambda_.1} parent=5 // pred_region
        %s246 = ssub.s32 %s16, 1
        %s247 = smul.u32 16, %s21
        %p248 = scmp.lt.s32.totalorder %s247, 31
        %s249 = scalar_select %p248, %s247, 31
        %s250 = smul.addr %s249, 8
        %s251 = scalar_lea.vmem %s0, %s250
        %p252 = pneg %p42
        %p253 = pneg %p39
        %p254 = pneg %p63
        %p255 = pneg %p60
        %p256 = pneg %p84
        %p257 = pneg %p81
        %p258 = pneg %p105
        %p259 = pneg %p102
        %p260 = pneg %p126
        %p261 = pneg %p123
        %p262 = pneg %p147
        %p263 = pneg %p144
        %p264 = pneg %p168
        %p265 = pneg %p165
        %p266 = pneg %p194
        %p267 = pneg %p191
        %s268 = sand.u32 %s181, 1
        %s269 = scalar_lea.sflag [#allocation3], %s268
        %s270 = sand.u32 %s181, 1
        %s271 = smul.addr %s270, 4
        %s272 = scalar_lea.vmem [#allocation2], %s271
        %s273 = smul.u32 16, %s21
        %p274 = scmp.lt.s32.totalorder %s273, 31
        %s275 = scalar_select %p274, %s273, 31
        %s276 = smul.addr %s275, 8
        %s277 = scalar_lea.vmem %s0, %s276
        %s278 = smul.u32 16, %s21
        %v279 = vld [vmem:[%s277] sm:$0xff]
        %v280 = vld [vmem:[%s277 + $0x8] sm:$0xff]
        %v281 = vld [vmem:[%s277 + $0x10] sm:$0xff]
        %v282 = vld [vmem:[%s277 + $0x18] sm:$0xff]
        %v283 = vld [vmem:[%s277 + $0x20] sm:$0xff]
        %v284 = vld [vmem:[%s277 + $0x28] sm:$0xff]
        %v285 = vld [vmem:[%s277 + $0x30] sm:$0xff]
        %v286 = vld [vmem:[%s277 + $0x38] sm:$0xff]
        %v287 = vld [vmem:[%s277 + $0x40] sm:$0xff]
        %v288 = vld [vmem:[%s277 + $0x48] sm:$0xff]
        %v289 = vld [vmem:[%s277 + $0x50] sm:$0xff]
        %v290 = vld [vmem:[%s277 + $0x58] sm:$0xff]
        %v291 = vld [vmem:[%s277 + $0x60] sm:$0xff]
        %v292 = vld [vmem:[%s277 + $0x68] sm:$0xff]
        %v293 = vld [vmem:[%s277 + $0x70] sm:$0xff]
        %v294 = vld [vmem:[%s277 + $0x78] sm:$0xff]
        %v295 = vld [vmem:[%s1] sm:$0xff]
        %v296 = vld [vmem:[%s1 + $0x8] sm:$0xff]
        %v297 = vld [vmem:[%s1 + $0x10] sm:$0xff]
        %v298 = vld [vmem:[%s1 + $0x18] sm:$0xff]
        %v299 = vld [vmem:[%s2] sm:$0xff]
        %v300 = vld [vmem:[%s2 + $0x8] sm:$0xff]
        %v301 = vld [vmem:[%s2 + $0x10] sm:$0xff]
        %v302 = vld [vmem:[%s2 + $0x18] sm:$0xff]
        %304 = vset.pattern.permute.xlu0 0
        %305 = vperm.xlu0 %304, %v299
        %v306 = vpop.permute.xlu0 %305
        %309 = vset.pattern.permute.xlu0 0
        %310 = vperm.xlu0 %309, %v300
        %v311 = vpop.permute.xlu0 %310
        %314 = vset.pattern.permute.xlu0 0
        %315 = vperm.xlu0 %314, %v301
        %v316 = vpop.permute.xlu0 %315
        %319 = vset.pattern.permute.xlu0 0
        %320 = vperm.xlu0 %319, %v302
        %v321 = vpop.permute.xlu0 %320
        %vm323 = vcmask 130048
        %v325 = vsel %vm323, %v295, 0
        %v328 = vsel %vm323, %v296, 0
        %v331 = vsel %vm323, %v297, 0
        %v334 = vsel %vm323, %v298, 0
        %v337 = vsel %vm323, %v279, 0
        %v340 = vsel %vm323, %v280, 0
        %v343 = vsel %vm323, %v281, 0
        %v346 = vsel %vm323, %v282, 0
        %v349 = vsel %vm323, %v283, 0
        %v352 = vsel %vm323, %v284, 0
        %v355 = vsel %vm323, %v285, 0
        %v358 = vsel %vm323, %v286, 0
        %v361 = vsel %vm323, %v287, 0
        %v364 = vsel %vm323, %v288, 0
        %v367 = vsel %vm323, %v289, 0
        %v370 = vsel %vm323, %v290, 0
        %v373 = vsel %vm323, %v291, 0
        %v376 = vsel %vm323, %v292, 0
        %v379 = vsel %vm323, %v293, 0
        %v382 = vsel %vm323, %v294, 0
        %384 = vmatprep.subr.mxu0 0.0
        %385 = vmatpush1.xpose.msra.mxu0 %v337
        %386 = vmatprep.subr.mxu0 0.0
        %387 = vmatpush1.xpose.msra.mxu0 %v340
        %388 = vmatprep.subr.mxu0 0.0
        %389 = vmatpush1.xpose.msra.mxu0 %v343
        %390 = vmatprep.subr.mxu0 0.0
        %391 = vmatpush1.xpose.msra.mxu0 %v346
        %392 = vmatprep.subr.mxu0 0.0
        %393 = vmatpush1.xpose.msra.mxu0 %v349
        %394 = vmatprep.subr.mxu0 0.0
        %395 = vmatpush1.xpose.msra.mxu0 %v352
        %396 = vmatprep.subr.mxu0 0.0
        %397 = vmatpush1.xpose.msra.mxu0 %v355
        %398 = vmatprep.subr.mxu0 0.0
        %399 = vmatpush1.xpose.msra.mxu0 %v358
        %400 = vmatprep.subr.mxu0 0.0
        %401 = vmatpush1.xpose.msra.mxu0 %v361
        %402 = vmatprep.subr.mxu0 0.0
        %403 = vmatpush1.xpose.msra.mxu0 %v364
        %404 = vmatprep.subr.mxu0 0.0
        %405 = vmatpush1.xpose.msra.mxu0 %v367
        %406 = vmatprep.subr.mxu0 0.0
        %407 = vmatpush1.xpose.msra.mxu0 %v370
        %408 = vmatprep.subr.mxu0 0.0
        %409 = vmatpush1.xpose.msra.mxu0 %v373
        %410 = vmatprep.subr.mxu0 0.0
        %411 = vmatpush1.xpose.msra.mxu0 %v376
        %412 = vmatprep.subr.mxu0 0.0
        %413 = vmatpush1.xpose.msra.mxu0 %v379
        %414 = vmatprep.subr.mxu0 0.0
        %415 = vmatpush1.xpose.msra.mxu0 %v382
        %416 = vmatprep.subr.mxu0 0.0
        %417 = vmatpush1.xpose.msra.mxu0 0.0
        %418 = vmatprep.subr.mxu0 0.0
        %419 = vmatpush1.xpose.msra.mxu0 0.0
        %420 = vmatprep.subr.mxu0 0.0
        %421 = vmatpush1.xpose.msra.mxu0 0.0
        %422 = vmatprep.subr.mxu0 0.0
        %423 = vmatpush1.xpose.msra.mxu0 0.0
        %424 = vmatprep.subr.mxu0 0.0
        %425 = vmatpush1.xpose.msra.mxu0 0.0
        %426 = vmatprep.subr.mxu0 0.0
        %427 = vmatpush1.xpose.msra.mxu0 0.0
        %428 = vmatprep.subr.mxu0 0.0
        %429 = vmatpush1.xpose.msra.mxu0 0.0
        %430 = vmatprep.subr.mxu0 0.0
        %431 = vmatpush1.xpose.msra.mxu0 0.0
        %432 = vmatprep.subr.mxu0 0.0
        %433 = vmatpush1.xpose.msra.mxu0 0.0
        %434 = vmatprep.subr.mxu0 0.0
        %435 = vmatpush1.xpose.msra.mxu0 0.0
        %436 = vmatprep.subr.mxu0 0.0
        %437 = vmatpush1.xpose.msra.mxu0 0.0
        %438 = vmatprep.subr.mxu0 0.0
        %439 = vmatpush1.xpose.msra.mxu0 0.0
        %440 = vmatprep.subr.mxu0 0.0
        %441 = vmatpush1.xpose.msra.mxu0 0.0
        %442 = vmatprep.subr.mxu0 0.0
        %443 = vmatpush1.xpose.msra.mxu0 0.0
        %444 = vmatprep.subr.mxu0 0.0
        %445 = vmatpush1.xpose.msra.mxu0 0.0
        %446 = vmatprep.subr.mxu0 0.0
        %447 = vmatpush1.xpose.msra.mxu0 0.0
        %448 = vmatprep.mubr.f32.mxu0 0.0
        %449 = vmatmul.mubr.f32.gmra.mrb[0].mxu0 %v325
        %v450 = vpop.f32.mrb[0].mxu0
        %v451 = vadd.f32 %v306, %v450
        %v452 = vpop.f32.mrb[0].mxu0
        %453 = vmatprep.mubr.f32.mxu0 0.0
        %454 = vmatmul.mubr.f32.gmra.mrb[0].mxu0 %v328
        %v455 = vpop.f32.mrb[0].mxu0
        %v456 = vadd.f32 %v311, %v455
        %v457 = vpop.f32.mrb[0].mxu0
        %458 = vmatprep.mubr.f32.mxu0 0.0
        %459 = vmatmul.mubr.f32.gmra.mrb[0].mxu0 %v331
        %v460 = vpop.f32.mrb[0].mxu0
        %v461 = vadd.f32 %v316, %v460
        %v462 = vpop.f32.mrb[0].mxu0
        %463 = vmatprep.mubr.f32.mxu0 0.0
        %464 = vmatmul.mubr.f32.gmra.mrb[0].mxu0 %v334
        %v465 = vpop.f32.mrb[0].mxu0
        %v466 = vadd.f32 %v321, %v465
        %v467 = vpop.f32.mrb[0].mxu0
        %468 = vdwg.mxu0
        %v469 = vxor.u32 %v451, 2147483648
        %v470 = vxor.u32 %v456, 2147483648
        %v471 = vxor.u32 %v461, 2147483648
        %v472 = vxor.u32 %v466, 2147483648
        %v473 = vmul.f32 %v469, 1.442695
        %v474 = vpow.pop %v473
        %v475 = vmul.f32 %v470, 1.442695
        %v476 = vpow.pop %v475
        %v477 = vmul.f32 %v471, 1.442695
        %v478 = vpow.pop %v477
        %v479 = vmul.f32 %v472, 1.442695
        %v480 = vpow.pop %v479
        %v481 = vadd.f32 %v474, 1.0
        %v482 = vadd.f32 %v476, 1.0
        %v483 = vadd.f32 %v478, 1.0
        %v484 = vadd.f32 %v480, 1.0
        %v485 = vrcp.pop %v481
        %v486 = vmul.f32 1.0, %v485
        %v487 = vrcp.pop %v482
        %v488 = vmul.f32 1.0, %v487
        %v489 = vrcp.pop %v483
        %v490 = vmul.f32 1.0, %v489
        %v491 = vrcp.pop %v484
        %v492 = vmul.f32 1.0, %v491
        %v493 = vmul.f32 %v451, %v486
        %v494 = vmul.f32 %v456, %v488
        %v495 = vmul.f32 %v461, %v490
        %v496 = vmul.f32 %v466, %v492
        %v497 = vld [vmem:[%s3] sm:$0xff]
        %v498 = vld [vmem:[%s3 + $0x8] sm:$0xff]
        %v499 = vld [vmem:[%s3 + $0x10] sm:$0xff]
        %v500 = vld [vmem:[%s3 + $0x18] sm:$0xff]
        %v501 = vld [vmem:[%s4] sm:$0xff]
        %v502 = vld [vmem:[%s4 + $0x8] sm:$0xff]
        %v503 = vld [vmem:[%s4 + $0x10] sm:$0xff]
        %v504 = vld [vmem:[%s4 + $0x18] sm:$0xff]
        %506 = vset.pattern.permute.xlu0 0
        %507 = vperm.xlu0 %506, %v501
        %v508 = vpop.permute.xlu0 %507
        %511 = vset.pattern.permute.xlu0 0
        %512 = vperm.xlu0 %511, %v502
        %v513 = vpop.permute.xlu0 %512
        %516 = vset.pattern.permute.xlu0 0
        %517 = vperm.xlu0 %516, %v503
        %v518 = vpop.permute.xlu0 %517
        %521 = vset.pattern.permute.xlu0 0
        %522 = vperm.xlu0 %521, %v504
        %v523 = vpop.permute.xlu0 %522
        %vm525 = vcmask 261120
        %v527 = vsel %vm525, %v497, 0
        %v530 = vsel %vm525, %v498, 0
        %v533 = vsel %vm525, %v499, 0
        %v536 = vsel %vm525, %v500, 0
        %538 = vmatprep.subr.mxu0 0.0
        %539 = vmatpush1.msra.mxu0 %v493
        %540 = vmatprep.subr.mxu0 0.0
        %541 = vmatpush1.msra.mxu0 %v494
        %542 = vmatprep.subr.mxu0 0.0
        %543 = vmatpush1.msra.mxu0 %v495
        %544 = vmatprep.subr.mxu0 0.0
        %545 = vmatpush1.msra.mxu0 %v496
        %546 = vmatprep.subr.mxu0 0.0
        %547 = vmatpush1.msra.mxu0 0.0
        %548 = vmatprep.subr.mxu0 0.0
        %549 = vmatpush1.msra.mxu0 0.0
        %550 = vmatprep.subr.mxu0 0.0
        %551 = vmatpush1.msra.mxu0 0.0
        %552 = vmatprep.subr.mxu0 0.0
        %553 = vmatpush1.msra.mxu0 0.0
        %554 = vmatprep.subr.mxu0 0.0
        %555 = vmatpush1.msra.mxu0 0.0
        %556 = vmatprep.subr.mxu0 0.0
        %557 = vmatpush1.msra.mxu0 0.0
        %558 = vmatprep.subr.mxu0 0.0
        %559 = vmatpush1.msra.mxu0 0.0
        %560 = vmatprep.subr.mxu0 0.0
        %561 = vmatpush1.msra.mxu0 0.0
        %562 = vmatprep.subr.mxu0 0.0
        %563 = vmatpush1.msra.mxu0 0.0
        %564 = vmatprep.subr.mxu0 0.0
        %565 = vmatpush1.msra.mxu0 0.0
        %566 = vmatprep.subr.mxu0 0.0
        %567 = vmatpush1.msra.mxu0 0.0
        %568 = vmatprep.subr.mxu0 0.0
        %569 = vmatpush1.msra.mxu0 0.0
        %570 = vmatprep.subr.mxu0 0.0
        %571 = vmatpush1.msra.mxu0 0.0
        %572 = vmatprep.subr.mxu0 0.0
        %573 = vmatpush1.msra.mxu0 0.0
        %574 = vmatprep.subr.mxu0 0.0
        %575 = vmatpush1.msra.mxu0 0.0
        %576 = vmatprep.subr.mxu0 0.0
        %577 = vmatpush1.msra.mxu0 0.0
        %578 = vmatprep.subr.mxu0 0.0
        %579 = vmatpush1.msra.mxu0 0.0
        %580 = vmatprep.subr.mxu0 0.0
        %581 = vmatpush1.msra.mxu0 0.0
        %582 = vmatprep.subr.mxu0 0.0
        %583 = vmatpush1.msra.mxu0 0.0
        %584 = vmatprep.subr.mxu0 0.0
        %585 = vmatpush1.msra.mxu0 0.0
        %586 = vmatprep.subr.mxu0 0.0
        %587 = vmatpush1.msra.mxu0 0.0
        %588 = vmatprep.subr.mxu0 0.0
        %589 = vmatpush1.msra.mxu0 0.0
        %590 = vmatprep.subr.mxu0 0.0
        %591 = vmatpush1.msra.mxu0 0.0
        %592 = vmatprep.subr.mxu0 0.0
        %593 = vmatpush1.msra.mxu0 0.0
        %594 = vmatprep.subr.mxu0 0.0
        %595 = vmatpush1.msra.mxu0 0.0
        %596 = vmatprep.subr.mxu0 0.0
        %597 = vmatpush1.msra.mxu0 0.0
        %598 = vmatprep.subr.mxu0 0.0
        %599 = vmatpush1.msra.mxu0 0.0
        %600 = vmatprep.subr.mxu0 0.0
        %601 = vmatpush1.msra.mxu0 0.0
        %602 = vmatprep.mubr.f32.mxu0 0.0
        %603 = vmatmul.mubr.f32.gmra.mrb[0].mxu0 %v527
        %v604 = vpop.f32.mrb[0].mxu0
        %v605 = vadd.f32 %v508, %v604
        %v606 = vpop.f32.mrb[0].mxu0
        %607 = vmatprep.mubr.f32.mxu0 0.0
        %608 = vmatmul.mubr.f32.gmra.mrb[0].mxu0 %v530
        %v609 = vpop.f32.mrb[0].mxu0
        %v610 = vadd.f32 %v513, %v609
        %v611 = vpop.f32.mrb[0].mxu0
        %612 = vmatprep.mubr.f32.mxu0 0.0
        %613 = vmatmul.mubr.f32.gmra.mrb[0].mxu0 %v533
        %v614 = vpop.f32.mrb[0].mxu0
        %v615 = vadd.f32 %v518, %v614
        %v616 = vpop.f32.mrb[0].mxu0
        %617 = vmatprep.mubr.f32.mxu0 0.0
        %618 = vmatmul.mubr.f32.gmra.mrb[0].mxu0 %v536
        %v619 = vpop.f32.mrb[0].mxu0
        %v620 = vadd.f32 %v523, %v619
        %v621 = vpop.f32.mrb[0].mxu0
        %622 = vdwg.mxu0
        %v623 = vxor.u32 %v605, 2147483648
        %v624 = vxor.u32 %v610, 2147483648
        %v625 = vxor.u32 %v615, 2147483648
        %v626 = vxor.u32 %v620, 2147483648
        %v627 = vmul.f32 %v623, 1.442695
        %v628 = vpow.pop %v627
        %v629 = vmul.f32 %v624, 1.442695
        %v630 = vpow.pop %v629
        %v631 = vmul.f32 %v625, 1.442695
        %v632 = vpow.pop %v631
        %v633 = vmul.f32 %v626, 1.442695
        %v634 = vpow.pop %v633
        %v635 = vadd.f32 %v628, 1.0
        %v636 = vadd.f32 %v630, 1.0
        %v637 = vadd.f32 %v632, 1.0
        %v638 = vadd.f32 %v634, 1.0
        %v639 = vrcp.pop %v635
        %v640 = vmul.f32 1.0, %v639
        %v641 = vrcp.pop %v636
        %v642 = vmul.f32 1.0, %v641
        %v643 = vrcp.pop %v637
        %v644 = vmul.f32 1.0, %v643
        %v645 = vrcp.pop %v638
        %v646 = vmul.f32 1.0, %v645
        %v647 = vmul.f32 %v605, %v640
        %v648 = vmul.f32 %v610, %v642
        %v649 = vmul.f32 %v615, %v644
        %v650 = vmul.f32 %v620, %v646
        %v651 = vld [vmem:[%s5] sm:$0x7]
        %v652 = vld [vmem:[%s6] sm:$0x7]
        %654 = vset.pattern.permute.xlu0 0
        %655 = vperm.xlu0 %654, %v652
        %v656 = vpop.permute.xlu0 %655
        %v659 = vsel %vm525, %v651, 0
        %661 = vmatprep.subr.mxu0 0.0
        %662 = vmatpush1.msra.mxu0 %v647
        %663 = vmatprep.subr.mxu0 0.0
        %664 = vmatpush1.msra.mxu0 %v648
        %665 = vmatprep.subr.mxu0 0.0
        %666 = vmatpush1.msra.mxu0 %v649
        %667 = vmatprep.subr.mxu0 0.0
        %668 = vmatpush1.msra.mxu0 %v650
        %669 = vmatprep.subr.mxu0 0.0
        %670 = vmatpush1.msra.mxu0 0.0
        %671 = vmatprep.subr.mxu0 0.0
        %672 = vmatpush1.msra.mxu0 0.0
        %673 = vmatprep.subr.mxu0 0.0
        %674 = vmatpush1.msra.mxu0 0.0
        %675 = vmatprep.subr.mxu0 0.0
        %676 = vmatpush1.msra.mxu0 0.0
        %677 = vmatprep.subr.mxu0 0.0
        %678 = vmatpush1.msra.mxu0 0.0
        %679 = vmatprep.subr.mxu0 0.0
        %680 = vmatpush1.msra.mxu0 0.0
        %681 = vmatprep.subr.mxu0 0.0
        %682 = vmatpush1.msra.mxu0 0.0
        %683 = vmatprep.subr.mxu0 0.0
        %684 = vmatpush1.msra.mxu0 0.0
        %685 = vmatprep.subr.mxu0 0.0
        %686 = vmatpush1.msra.mxu0 0.0
        %687 = vmatprep.subr.mxu0 0.0
        %688 = vmatpush1.msra.mxu0 0.0
        %689 = vmatprep.subr.mxu0 0.0
        %690 = vmatpush1.msra.mxu0 0.0
        %691 = vmatprep.subr.mxu0 0.0
        %692 = vmatpush1.msra.mxu0 0.0
        %693 = vmatprep.subr.mxu0 0.0
        %694 = vmatpush1.msra.mxu0 0.0
        %695 = vmatprep.subr.mxu0 0.0
        %696 = vmatpush1.msra.mxu0 0.0
        %697 = vmatprep.subr.mxu0 0.0
        %698 = vmatpush1.msra.mxu0 0.0
        %699 = vmatprep.subr.mxu0 0.0
        %700 = vmatpush1.msra.mxu0 0.0
        %701 = vmatprep.subr.mxu0 0.0
        %702 = vmatpush1.msra.mxu0 0.0
        %703 = vmatprep.subr.mxu0 0.0
        %704 = vmatpush1.msra.mxu0 0.0
        %705 = vmatprep.subr.mxu0 0.0
        %706 = vmatpush1.msra.mxu0 0.0
        %707 = vmatprep.subr.mxu0 0.0
        %708 = vmatpush1.msra.mxu0 0.0
        %709 = vmatprep.subr.mxu0 0.0
        %710 = vmatpush1.msra.mxu0 0.0
        %711 = vmatprep.subr.mxu0 0.0
        %712 = vmatpush1.msra.mxu0 0.0
        %713 = vmatprep.subr.mxu0 0.0
        %714 = vmatpush1.msra.mxu0 0.0
        %715 = vmatprep.subr.mxu0 0.0
        %716 = vmatpush1.msra.mxu0 0.0
        %717 = vmatprep.subr.mxu0 0.0
        %718 = vmatpush1.msra.mxu0 0.0
        %719 = vmatprep.subr.mxu0 0.0
        %720 = vmatpush1.msra.mxu0 0.0
        %721 = vmatprep.subr.mxu0 0.0
        %722 = vmatpush1.msra.mxu0 0.0
        %723 = vmatprep.subr.mxu0 0.0
        %724 = vmatpush1.msra.mxu0 0.0
        %725 = vmatprep.mubr.f32.mxu0 0.0
        %726 = vmatmul.mubr.f32.gmra.mrb[0].mxu0 %v659
        %v727 = vpop.f32.mrb[0].mxu0
        %v728 = vadd.f32 %v656, %v727
        %v729 = vpop.f32.mrb[0].mxu0
        %730 = vdwg.mxu0
        %v731 = vxor.u32 %v728, 2147483648
        %v732 = vmul.f32 %v731, 1.442695
        %v733 = vpow.pop %v732
        %v734 = vadd.f32 %v733, 1.0
        %v735 = vrcp.pop %v734
        %v736 = vmul.f32 1.0, %v735
        %v737 = vmul.f32 %v728, %v736
        %738 = vst [vmem:[%s272] sm:$0x7] %v737
        %s739 = sand.u32 %s181, 1
        %s740 = scalar_lea.sflag [#allocation3], %s739
        %s741 = sand.u32 %s181, 1
        %s742 = smul.addr %s741, 4
        %s743 = scalar_lea.vmem [#allocation2], %s742
        // Predicated region
        $region49: #{_lambda_.1} parent=47 // pred_check
          %p744 = pneg %p191
        $region50: #{_lambda_.1} parent=47 // pred_check_branch
          %746 = sbr.rel (%p744) target = $region52
        $region51: #{_lambda_.1} parent=47 // pred_region
          %s748 = ssub.s32 64, 64
          %749 = vsyncadd %s740, %s748
          %s750 = smul.addr %s21, 64
          %s751 = scalar_lea.hbm %s7, %s750
          %s753 = sshll.u32 %s743, 4
          %s754 = int_to_ptr.vmem [resolvable:$true] %s753
          %756 = dma.vmem_to_hbm [thread:$0]  %s754, 64, %s751, %s740
        $region52: #{_lambda_.1} parent=47 // pred_fallthru
          _
      $region48: #{_lambda_.1} parent=5 // pred_fallthru
        _
      %p757 = scmp.le.s32.totalorder 2, %s16
      // Predicated region
      $region53: #{_lambda_.1} parent=5 // pred_check
        %p758 = pneg %p757
      $region54: #{_lambda_.1} parent=5 // pred_check_branch
        %760 = sbr.rel (%p758) target = $region56
      $region55: #{_lambda_.1} parent=5 // pred_region
        %s761 = ssub.s32 %s16, 2
        // Predicated region
        $region57: #{_lambda_.1} parent=55 // pred_check
          %p762 = pneg %p197
        $region58: #{_lambda_.1} parent=55 // pred_check_branch
          %764 = sbr.rel (%p762) target = $region60
        $region59: #{_lambda_.1} parent=55 // pred_region
          %s765 = sand.u32 %s182, 1
          %s766 = scalar_lea.sflag [#allocation3], %s765
          %s767 = sand.u32 %s182, 1
          %s768 = smul.addr %s767, 4
          %s769 = scalar_lea.vmem [#allocation2], %s768
          %770 = dma.done %s766, 64
        $region60: #{_lambda_.1} parent=55 // pred_fallthru
          _
      $region56: #{_lambda_.1} parent=5 // pred_fallthru
        _
    $region6: #{_lambda_.1} parent=1 // loop_footer
      %s20 = sadd.s32 1, %s16
    $region7: #{_lambda_.1} parent=1 // loop_footer_branch
      %15 = sbr.rel target = $region3
    $region8: #{_lambda_.1} parent=1 // loop_exit
      _
    %771 = vsyncpa [#allocation3], 1
    %s772 = scalar_lea.sflag [#allocation3], 1
    %773 = vsyncpa %s772, 1

</llo_original>
